<compile_context>
chip_gen: v7x
topology: tpu7x:2x2x1
jax: 0.10.0
libtpu: 0.0.40
codegen_flags: <defaults>
</compile_context>

<pallas_src>
import jax
import jax.numpy as jnp
from jax.experimental import pallas as pl


def _cls_pos_kernel(x_ref, cls_ref, pos_body_ref, pos_cls_ref,
                    o_body_ref, o_cls_ref):
    # x_ref:        (B, S*D)   flattened sequence rows (lane-dense, 128-aligned)
    # cls_ref:      (B, D)     class-token rows
    # pos_body_ref: (1, S*D)   flattened pos-emb rows 1..S (sublane-broadcast)
    # pos_cls_ref:  (1, D)     pos-emb row 0
    # o_body_ref:   (B, S*D)
    # o_cls_ref:    (B, D)
    # Two independent broadcast-adds -> two aligned stores, zero XLU work.
    o_body_ref[...] = x_ref[...] + pos_body_ref[...]
    o_cls_ref[...] = cls_ref[...] + pos_cls_ref[...]


def class_position_embedding_forward(x, class_token, pos_emb_table):
    """x: (B, S, D); class_token: (B, 1, D); pos_emb_table: (S+1, D).

    Returns (B, S+1, D) = concat(class_token, x, dim=1) + pos_emb_table[None].
    """
    B, S, D = x.shape
    assert class_token.shape == (B, 1, D)
    assert pos_emb_table.shape == (S + 1, D)

    # Lane-dense presentation; contiguous reshapes/slices (no copies).
    x_flat = x.reshape(B, S * D)
    cls_flat = class_token.reshape(B, D)
    pos_cls = pos_emb_table[0:1, :]                     # (1, D)      -> cls row add
    pos_body = pos_emb_table[1:, :].reshape(1, S * D)   # (1, S*D)    -> body rows add

    out_body, out_cls = pl.pallas_call(
        _cls_pos_kernel,
        grid=(1,),  # single step: the whole ~70 KB working set fits VMEM everywhere
        out_shape=(
            jax.ShapeDtypeStruct((B, S * D), x.dtype),
            jax.ShapeDtypeStruct((B, D), x.dtype),
        ),
        in_specs=[
            pl.BlockSpec((B, S * D), lambda i: (0, 0)),
            pl.BlockSpec((B, D), lambda i: (0, 0)),
            pl.BlockSpec((1, S * D), lambda i: (0, 0)),
            pl.BlockSpec((1, D), lambda i: (0, 0)),
        ],
        out_specs=(
            pl.BlockSpec((B, S * D), lambda i: (0, 0)),
            pl.BlockSpec((B, D), lambda i: (0, 0)),
        ),
    )(x_flat, cls_flat, pos_body, pos_cls)

    # Stitch cls row in front of the body rows (cheap XLA concat, fuses downstream).
    return jnp.concatenate(
        [out_cls.reshape(B, 1, D), out_body.reshape(B, S, D)], axis=1
    )


if __name__ == "__main__":
    # Shapes implied by the module: batch=16 (class_token hard-codes 16),
    # seq_length=16 (positions 0..16 -> Embedding(17, d_model)). Pick d_model=32.
    d_model = 32
    seq_length = 16
    batch = 16

    key = jax.random.PRNGKey(0)
    k_x, k_cls, k_emb = jax.random.split(key, 3)

    # Deterministic parameter init mirroring PyTorch defaults:
    #   nn.Embedding weight ~ N(0, 1); class_token = torch.rand -> U[0, 1).
    pos_emb_table = jax.random.normal(k_emb, (seq_length + 1, d_model), jnp.float32)
    class_token = jax.random.uniform(k_cls, (batch, 1, d_model), jnp.float32)
    x = jax.random.normal(k_x, (batch, seq_length, d_model), jnp.float32)

    out = class_position_embedding_forward(x, class_token, pos_emb_table)
    out = jax.block_until_ready(out)

    # Pure-JAX reference check of the forward semantics.
    ref = jnp.concatenate([class_token, x], axis=1) + pos_emb_table[None, :, :]
    assert out.shape == (batch, seq_length + 1, d_model)
    assert jnp.allclose(out, ref, atol=1e-6), "mismatch vs reference"

    print("KERNEL_OK")
</pallas_src>

<mosaic_0001>
module attributes {stable_mosaic.version = 11 : i64} {
  func.func @_cls_pos_kernel(%arg0: i32, %arg1: memref<16x512xf32, #tpu.memory_space<vmem>>, %arg2: memref<16x32xf32, #tpu.memory_space<vmem>>, %arg3: memref<1x512xf32, #tpu.memory_space<vmem>>, %arg4: memref<1x32xf32, #tpu.memory_space<vmem>>, %arg5: memref<16x512xf32, #tpu.memory_space<vmem>>, %arg6: memref<16x32xf32, #tpu.memory_space<vmem>>) attributes {dimension_semantics = [#tpu.dimension_semantics<arbitrary>], iteration_bounds = array<i64: 1>, scalar_prefetch = 0 : i64, scratch_operands = 0 : i64, tpu.core_type = #tpu.core_type<tc>, window_params = [{pipeline_mode = #tpu.pipeline_mode<synchronous>, transform_indices = @transform_0, window_bounds = array<i64: 16, 512>}, {pipeline_mode = #tpu.pipeline_mode<synchronous>, transform_indices = @transform_1, window_bounds = array<i64: 16, 32>}, {pipeline_mode = #tpu.pipeline_mode<synchronous>, transform_indices = @transform_2, window_bounds = array<i64: 1, 512>}, {pipeline_mode = #tpu.pipeline_mode<synchronous>, transform_indices = @transform_3, window_bounds = array<i64: 1, 32>}, {pipeline_mode = #tpu.pipeline_mode<synchronous>, transform_indices = @transform_4, window_bounds = array<i64: 16, 512>}, {pipeline_mode = #tpu.pipeline_mode<synchronous>, transform_indices = @transform_5, window_bounds = array<i64: 16, 32>}]} {
    %c0 = arith.constant 0 : index
    %c0_0 = arith.constant 0 : index
    %0 = vector.load %arg1[%c0, %c0_0] : memref<16x512xf32, #tpu.memory_space<vmem>>, vector<16x512xf32>
    %c0_1 = arith.constant 0 : index
    %c0_2 = arith.constant 0 : index
    %1 = vector.load %arg3[%c0_1, %c0_2] : memref<1x512xf32, #tpu.memory_space<vmem>>, vector<1x512xf32>
    %2 = vector.broadcast %1 : vector<1x512xf32> to vector<16x512xf32>
    %3 = arith.addf %0, %2 : vector<16x512xf32>
    %c0_3 = arith.constant 0 : index
    %c0_4 = arith.constant 0 : index
    %4 = vector.load %arg5[%c0_3, %c0_4] : memref<16x512xf32, #tpu.memory_space<vmem>>, vector<16x512xf32>
    tpu.vector_store %arg5[%c0_3, %c0_4], %3 {strides = array<i32>} : memref<16x512xf32, #tpu.memory_space<vmem>>, vector<16x512xf32>,
    %c0_5 = arith.constant 0 : index
    %c0_6 = arith.constant 0 : index
    %5 = vector.load %arg2[%c0_5, %c0_6] : memref<16x32xf32, #tpu.memory_space<vmem>>, vector<16x32xf32>
    %c0_7 = arith.constant 0 : index
    %c0_8 = arith.constant 0 : index
    %6 = vector.load %arg4[%c0_7, %c0_8] : memref<1x32xf32, #tpu.memory_space<vmem>>, vector<1x32xf32>
    %7 = vector.broadcast %6 : vector<1x32xf32> to vector<16x32xf32>
    %8 = arith.addf %5, %7 : vector<16x32xf32>
    %c0_9 = arith.constant 0 : index
    %c0_10 = arith.constant 0 : index
    %9 = vector.load %arg6[%c0_9, %c0_10] : memref<16x32xf32, #tpu.memory_space<vmem>>, vector<16x32xf32>
    tpu.vector_store %arg6[%c0_9, %c0_10], %8 {strides = array<i32>} : memref<16x32xf32, #tpu.memory_space<vmem>>, vector<16x32xf32>,
    return
  }
  func.func @transform_0(%arg0: i32) -> (i32, i32) {
    %c0_i32 = arith.constant 0 : i32
    %c0_i32_0 = arith.constant 0 : i32
    %c0_i32_1 = arith.constant 0 : i32
    return %c0_i32, %c0_i32_0 : i32, i32
  }
  func.func @transform_1(%arg0: i32) -> (i32, i32) {
    %c0_i32 = arith.constant 0 : i32
    %c0_i32_0 = arith.constant 0 : i32
    %c0_i32_1 = arith.constant 0 : i32
    return %c0_i32, %c0_i32_0 : i32, i32
  }
  func.func @transform_2(%arg0: i32) -> (i32, i32) {
    %c0_i32 = arith.constant 0 : i32
    %c0_i32_0 = arith.constant 0 : i32
    %c0_i32_1 = arith.constant 0 : i32
    return %c0_i32, %c0_i32_0 : i32, i32
  }
  func.func @transform_3(%arg0: i32) -> (i32, i32) {
    %c0_i32 = arith.constant 0 : i32
    %c0_i32_0 = arith.constant 0 : i32
    %c0_i32_1 = arith.constant 0 : i32
    return %c0_i32, %c0_i32_0 : i32, i32
  }
  func.func @transform_4(%arg0: i32) -> (i32, i32) {
    %c0_i32 = arith.constant 0 : i32
    %c0_i32_0 = arith.constant 0 : i32
    %c0_i32_1 = arith.constant 0 : i32
    return %c0_i32, %c0_i32_0 : i32, i32
  }
  func.func @transform_5(%arg0: i32) -> (i32, i32) {
    %c0_i32 = arith.constant 0 : i32
    %c0_i32_0 = arith.constant 0 : i32
    %c0_i32_1 = arith.constant 0 : i32
    return %c0_i32, %c0_i32_0 : i32, i32
  }
}

</mosaic_0001>

<llo_original>
// kernel: tpu_custom_call.1
$region0: #{tpu_custom_call.1}
  #allocation0 [shape = 'u32[]', space=smem, size = 0x4, offset = 0x4, fixed_abs, tag = 'smem constant byte address 0x4 - core index']
  #allocation1 [shape = 'u32[144,128]{1,0:T(1,128)}', space=vmem, size = 0x12000, scoped, tag = 'internal scratch']
  %s0 = inlined_call_operand.hbm [shape: f32[16,512], index: 0, kind: input, shape index: {}]
  %s1 = inlined_call_operand.hbm [shape: f32[16,32], index: 1, kind: input, shape index: {}]
  %s2 = inlined_call_operand.vmem [shape: f32[1,512], index: 2, kind: input, shape index: {}]
  %s3 = inlined_call_operand.vmem [shape: f32[1,32], index: 3, kind: input, shape index: {}]
  %s4 = inlined_call_operand.hbm [shape: f32[16,512], index: 4, kind: output, shape index: {0}]
  %s5 = inlined_call_operand.hbm [shape: f32[16,32], index: 5, kind: output, shape index: {1}]
  %6 = xla_tuple %s4, %s5
  %s7 = sld [smem:[#allocation0]]
  $region42: #{tpu_custom_call.1} parent=0
    _
  %s9 = ssub.s32 1, %s7
  %s10 = scalar_select 0, %s9, %s7
  $region1: #{tpu_custom_call.1} parent=0
    #allocation2 [shape = 'u8[32768]{0}', space=vmem, size = 0x8000, scoped, tag = 'input window, operand 0, single buffered']
    #allocation3 [shape = 's32[1]{0}', space=sflag, size = 0x4, scoped, tag = 'scoped memory for tpu_custom_call.1']
    #allocation4 [shape = 's32[1]{0}', space=sflag, size = 0x4, scoped, tag = 'scoped memory for tpu_custom_call.1']
    #allocation5 [shape = 'u8[8192]{0}', space=vmem, size = 0x2000, scoped, tag = 'input window, operand 1, single buffered']
    #allocation6 [shape = 's32[1]{0}', space=sflag, size = 0x4, scoped, tag = 'scoped memory for tpu_custom_call.1']
    #allocation7 [shape = 'u8[32768]{0}', space=vmem, size = 0x8000, scoped, tag = 'output window, operand 0, single buffered']
    #allocation8 [shape = 'u8[8192]{0}', space=vmem, size = 0x2000, scoped, tag = 'output window, operand 1, single buffered']
    #allocation9 [shape = 's32[1]{0}', space=sflag, size = 0x4, scoped, tag = 'scoped memory for tpu_custom_call.1']
    %11 = vsyncpa [#allocation3], 0
    %12 = vsyncpa [#allocation6], 0
    %13 = vsyncpa [#allocation4], 0
    %14 = vsyncpa [#allocation9], 0
    // Predicated region
    $region2: #{tpu_custom_call.1} parent=1 // pred_check
      _
    $region3: #{tpu_custom_call.1} parent=1 // pred_check_branch
      %16 = sbr.rel (0) target = $region5
    $region4: #{tpu_custom_call.1} parent=1 // pred_region
      %s18 = ssub.s32 1024, 1024
      %19 = vsyncadd [#allocation3], %s18
      %s20 = sshll.u32 [#allocation2], 4
      %s21 = int_to_ptr.vmem [resolvable:$true] %s20
      %26 = dma.hbm_to_vmem [thread:$0]  %s0, 1024, %s21, [#allocation3], 512, 512, 32
    $region5: #{tpu_custom_call.1} parent=1 // pred_fallthru
      _
    // Predicated region
    $region6: #{tpu_custom_call.1} parent=1 // pred_check
      _
    $region7: #{tpu_custom_call.1} parent=1 // pred_check_branch
      %28 = sbr.rel (0) target = $region9
    $region8: #{tpu_custom_call.1} parent=1 // pred_region
      %s30 = ssub.s32 256, 256
      %31 = vsyncadd [#allocation6], %s30
      %s32 = sshll.u32 [#allocation5], 4
      %s33 = int_to_ptr.vmem [resolvable:$true] %s32
      %38 = dma.hbm_to_vmem [thread:$0]  %s1, 256, %s33, [#allocation6], 128, 128, 8
    $region9: #{tpu_custom_call.1} parent=1 // pred_fallthru
      _
    // Predicated region
    $region10: #{tpu_custom_call.1} parent=1 // pred_check
      _
    $region11: #{tpu_custom_call.1} parent=1 // pred_check_branch
      %40 = sbr.rel (0) target = $region13
    $region12: #{tpu_custom_call.1} parent=1 // pred_region
      _
    $region13: #{tpu_custom_call.1} parent=1 // pred_fallthru
      _
    // Predicated region
    $region14: #{tpu_custom_call.1} parent=1 // pred_check
      _
    $region15: #{tpu_custom_call.1} parent=1 // pred_check_branch
      %42 = sbr.rel (0) target = $region17
    $region16: #{tpu_custom_call.1} parent=1 // pred_region
      _
    $region17: #{tpu_custom_call.1} parent=1 // pred_fallthru
      _
    // Predicated region
    $region18: #{tpu_custom_call.1} parent=1 // pred_check
      _
    $region19: #{tpu_custom_call.1} parent=1 // pred_check_branch
      %44 = sbr.rel (0) target = $region21
    $region20: #{tpu_custom_call.1} parent=1 // pred_region
      %45 = dma.done [#allocation3], 1024
    $region21: #{tpu_custom_call.1} parent=1 // pred_fallthru
      _
    // Predicated region
    $region22: #{tpu_custom_call.1} parent=1 // pred_check
      _
    $region23: #{tpu_custom_call.1} parent=1 // pred_check_branch
      %47 = sbr.rel (0) target = $region25
    $region24: #{tpu_custom_call.1} parent=1 // pred_region
      %48 = dma.done [#allocation6], 256
    $region25: #{tpu_custom_call.1} parent=1 // pred_fallthru
      _
    %v49 = vld [vmem:[#allocation2] sm:$0xff]
    %v50 = vld [vmem:[#allocation2 + $0x8] sm:$0xff]
    %v51 = vld [vmem:[#allocation2 + $0x10] sm:$0xff]
    %v52 = vld [vmem:[#allocation2 + $0x18] sm:$0xff]
    %v53 = vld [vmem:[#allocation2 + $0x20] sm:$0xff]
    %v54 = vld [vmem:[#allocation2 + $0x28] sm:$0xff]
    %v55 = vld [vmem:[#allocation2 + $0x30] sm:$0xff]
    %v56 = vld [vmem:[#allocation2 + $0x38] sm:$0xff]
    %v57 = vld [vmem:[%s2] sm:$0xf]
    %v59 = vlaneseq
    %v60 = vshrl.u32 %v59, 7
    %v61 = vsub.s32 0, %v60
    %v62 = vrot.slane %v57, %v61
    %v63 = vlaneseq
    %v64 = vshrl.u32 %v63, 7
    %v65 = vsub.s32 1, %v64
    %v66 = vrot.slane %v57, %v65
    %v67 = vlaneseq
    %v68 = vshrl.u32 %v67, 7
    %v69 = vsub.s32 2, %v68
    %v70 = vrot.slane %v57, %v69
    %v71 = vlaneseq
    %v72 = vshrl.u32 %v71, 7
    %v73 = vsub.s32 3, %v72
    %v74 = vrot.slane %v57, %v73
    %v79 = vadd.f32 %v49, %v62
    %v80 = vadd.f32 %v50, %v66
    %v81 = vadd.f32 %v51, %v70
    %v82 = vadd.f32 %v52, %v74
    %v83 = vadd.f32 %v53, %v62
    %v84 = vadd.f32 %v54, %v66
    %v85 = vadd.f32 %v55, %v70
    %v86 = vadd.f32 %v56, %v74
    %87 = vst [vmem:[#allocation7] sm:$0xff] %v79
    %88 = vst [vmem:[#allocation7 + $0x8] sm:$0xff] %v80
    %89 = vst [vmem:[#allocation7 + $0x10] sm:$0xff] %v81
    %90 = vst [vmem:[#allocation7 + $0x18] sm:$0xff] %v82
    %91 = vst [vmem:[#allocation7 + $0x20] sm:$0xff] %v83
    %92 = vst [vmem:[#allocation7 + $0x28] sm:$0xff] %v84
    %93 = vst [vmem:[#allocation7 + $0x30] sm:$0xff] %v85
    %94 = vst [vmem:[#allocation7 + $0x38] sm:$0xff] %v86
    %v95 = vld [vmem:[#allocation5] sm:$0xff]
    %v96 = vld [vmem:[#allocation5 + $0x8] sm:$0xff]
    %v97 = vld [vmem:[%s3] sm:$0x1]
    %v99 = vlaneseq
    %v100 = vshrl.u32 %v99, 7
    %v101 = vsub.s32 0, %v100
    %v102 = vrot.slane %v97, %v101
    %v104 = vadd.f32 %v95, %v102
    %v105 = vadd.f32 %v96, %v102
    %vm106 = vcmask 261120
    %107 = vst.msk [vmem:[#allocation8] sm:$0xff] %vm106, %v104
    %108 = vst.msk [vmem:[#allocation8 + $0x8] sm:$0xff] %vm106, %v105
    // Predicated region
    $region26: #{tpu_custom_call.1} parent=1 // pred_check
      _
    $region27: #{tpu_custom_call.1} parent=1 // pred_check_branch
      %110 = sbr.rel (0) target = $region29
    $region28: #{tpu_custom_call.1} parent=1 // pred_region
      %s112 = ssub.s32 1024, 1024
      %113 = vsyncadd [#allocation4], %s112
      %s114 = sshll.u32 [#allocation7], 4
      %s115 = int_to_ptr.vmem [resolvable:$true] %s114
      %120 = dma.vmem_to_hbm [thread:$0]  %s115, 1024, %s4, [#allocation4], 512, 512, 32
    $region29: #{tpu_custom_call.1} parent=1 // pred_fallthru
      _
    // Predicated region
    $region30: #{tpu_custom_call.1} parent=1 // pred_check
      _
    $region31: #{tpu_custom_call.1} parent=1 // pred_check_branch
      %122 = sbr.rel (0) target = $region33
    $region32: #{tpu_custom_call.1} parent=1 // pred_region
      %s124 = ssub.s32 256, 256
      %125 = vsyncadd [#allocation9], %s124
      %s126 = sshll.u32 [#allocation8], 4
      %s127 = int_to_ptr.vmem [resolvable:$true] %s126
      %132 = dma.vmem_to_hbm [thread:$0]  %s127, 256, %s5, [#allocation9], 128, 128, 8
    $region33: #{tpu_custom_call.1} parent=1 // pred_fallthru
      _
    // Predicated region
    $region34: #{tpu_custom_call.1} parent=1 // pred_check
      _
    $region35: #{tpu_custom_call.1} parent=1 // pred_check_branch
      %134 = sbr.rel (0) target = $region37
    $region36: #{tpu_custom_call.1} parent=1 // pred_region
      %135 = dma.done [#allocation4], 1024
    $region37: #{tpu_custom_call.1} parent=1 // pred_fallthru
      _
    // Predicated region
    $region38: #{tpu_custom_call.1} parent=1 // pred_check
      _
    $region39: #{tpu_custom_call.1} parent=1 // pred_check_branch
      %137 = sbr.rel (0) target = $region41
    $region40: #{tpu_custom_call.1} parent=1 // pred_region
      %138 = dma.done [#allocation9], 256
    $region41: #{tpu_custom_call.1} parent=1 // pred_fallthru
      _
    %139 = vsyncpa [#allocation3], 1
    %140 = vsyncpa [#allocation6], 1
    %141 = vsyncpa [#allocation4], 1
    %142 = vsyncpa [#allocation9], 1

</llo_original>
